<compile_context>
chip_gen: v7x
topology: tpu7x:2x2x1
jax: 0.10.0
libtpu: 0.0.40
codegen_flags: <defaults>
</compile_context>

<pallas_src>
import functools

import jax
import jax.numpy as jnp
from jax.experimental import pallas as pl
from jax.experimental.pallas import tpu as pltpu

NOISE_DIM = 32
FEATURE_DIM = 48
LEAKY_SLOPE = 0.2

# (fan_in, fan_out) for every Linear in self.fc (weights stored as (in, out) = W_torch.T).
LAYER_DIMS = [(32, 32), (32, 64), (64, 128), (128, 128), (128, 64), (64, FEATURE_DIM)]
NUM_LAYERS = len(LAYER_DIMS)

MAX_FAN_IN = 128                      # row extent of the packed weight slab
PACK_SLAB = 128                       # lane-aligned column slab per layer
PACK_W = PACK_SLAB * NUM_LAYERS       # 768 packed columns
LAYER_OFFS = [l * PACK_SLAB for l in range(NUM_LAYERS)]


def _round_up(x, m):
    return (x + m - 1) // m * m


def prepare_params(params):
    """One-time packing of the 6 Linear layers (call OUTSIDE the per-step path).

    params: list of (w, b) with w: (fan_in, fan_out) f32 (== PyTorch W.T), b: (1, fan_out).
    Returns:
      w_packed: (128, 768) bf16 -- layer l occupies rows [0:fan_in],
                columns [128*l : 128*l + fan_out]; the rest is zero padding.
      b_packed: (1, 768) f32, same column layout.
    """
    w_blocks, b_blocks = [], []
    for (fan_in, fan_out), (w, b) in zip(LAYER_DIMS, params):
        w = jnp.asarray(w, jnp.float32)
        b = jnp.asarray(b, jnp.float32).reshape(1, fan_out)
        w_blocks.append(
            jnp.pad(w.astype(jnp.bfloat16),
                    ((0, MAX_FAN_IN - fan_in), (0, PACK_SLAB - fan_out))))
        b_blocks.append(jnp.pad(b, ((0, 0), (0, PACK_SLAB - fan_out))))
    w_packed = jnp.concatenate(w_blocks, axis=1)    # (128, 768) bf16
    b_packed = jnp.concatenate(b_blocks, axis=1)    # (1, 768)   f32
    return w_packed, b_packed


def generator2_kernel(x_ref, w_ref, b_ref, o_ref):
    """Fused 6-layer MLP forward for one batch tile.

    x_ref: (tile_m, 32) bf16, w_ref: (128, 768) bf16, b_ref: (1, 768) f32,
    o_ref: (tile_m, 48) out dtype.  All params (~200 KiB) stay resident in VMEM
    (constant index_map), DMA'd once for the whole grid.
    """
    h = x_ref[...]                                        # bf16 (tile_m, 32)
    for layer, (fan_in, fan_out) in enumerate(LAYER_DIMS):
        off = LAYER_OFFS[layer]
        w = w_ref[:fan_in, off:off + fan_out]             # bf16 (fan_in, fan_out), static slice
        b = b_ref[:, off:off + fan_out]                   # f32  (1, fan_out)
        acc = jnp.dot(h, w, preferred_element_type=jnp.float32) + b   # f32 accumulate
        if layer < NUM_LAYERS - 1:                        # final Linear has no activation
            acc = jnp.maximum(acc, LEAKY_SLOPE * acc)     # LeakyReLU(0.2), kept in f32
            h = acc.astype(jnp.bfloat16)                  # single cast feeding next MXU op
        else:
            h = acc
    o_ref[...] = h.astype(o_ref.dtype)                    # (tile_m, 48) store


def _select_tile_m(n):
    """Per-batch tile: one grid step for small batches, >=2 steps (v7x megacore) for big."""
    n8 = _round_up(n, 8)
    if n8 <= 1024:
        return n8                                          # single step, no wasted rows
    return min(_round_up((n8 + 1) // 2, 256), 4096)        # >=2 parallel steps, 256-row grain


@functools.partial(jax.jit, static_argnames=("tile_m",))
def generator2_forward(noises, w_packed, b_packed, tile_m=None):
    """Run the fused MLP over the batch. `tile_m` (static) overrides auto selection."""
    n, d = noises.shape
    assert d == NOISE_DIM
    if tile_m is None:
        tile_m = _select_tile_m(n)
    assert tile_m % 8 == 0

    n_pad = pl.cdiv(n, tile_m) * tile_m
    x = noises.astype(jnp.bfloat16)                        # bf16 MXU input, half the DMA bytes
    if n_pad != n:
        x = jnp.pad(x, ((0, n_pad - n), (0, 0)))

    grid = (n_pad // tile_m,)

    flops = 2 * n_pad * sum(fi * fo for fi, fo in LAYER_DIMS)
    bytes_accessed = (n_pad * NOISE_DIM * 2 + n_pad * FEATURE_DIM * 4
                      + MAX_FAN_IN * PACK_W * 2 + PACK_W * 4)

    out = pl.pallas_call(
        generator2_kernel,
        out_shape=jax.ShapeDtypeStruct((n_pad, FEATURE_DIM), noises.dtype),
        grid_spec=pltpu.PrefetchScalarGridSpec(
            num_scalar_prefetch=0,
            grid=grid,
            in_specs=[
                pl.BlockSpec((tile_m, NOISE_DIM), lambda i: (i, 0)),
                pl.BlockSpec((MAX_FAN_IN, PACK_W), lambda i: (0, 0)),   # resident weights
                pl.BlockSpec((1, PACK_W), lambda i: (0, 0)),            # resident biases
            ],
            out_specs=pl.BlockSpec((tile_m, FEATURE_DIM), lambda i: (i, 0)),
        ),
        compiler_params=pltpu.CompilerParams(
            dimension_semantics=("parallel",),
        ),
        cost_estimate=pl.CostEstimate(
            flops=int(flops), transcendentals=0, bytes_accessed=int(bytes_accessed)),
    )(x, w_packed, b_packed)

    if n_pad != n:
        out = out[:n]
    return out


def init_params(key):
    """Deterministic PyTorch-style init: U(-1/sqrt(fan_in), +1/sqrt(fan_in))."""
    params = []
    for (fan_in, fan_out) in LAYER_DIMS:
        key, kw, kb = jax.random.split(key, 3)
        bound = 1.0 / jnp.sqrt(jnp.float32(fan_in))
        w = jax.random.uniform(kw, (fan_in, fan_out), jnp.float32, -bound, bound)
        b = jax.random.uniform(kb, (1, fan_out), jnp.float32, -bound, bound)
        params.append((w, b))
    return params


def reference_forward_f32(noises, params):
    """Pure f32 reference (matches the PyTorch module numerics)."""
    h = noises.astype(jnp.float32)
    for layer, (w, b) in enumerate(params):
        h = h @ w + b
        if layer < NUM_LAYERS - 1:
            h = jnp.maximum(h, LEAKY_SLOPE * h)
    return h


def reference_forward_bf16(noises, params):
    """Reference mirroring the kernel's bf16-input / f32-accumulate math."""
    h = noises.astype(jnp.bfloat16)
    for layer, (w, b) in enumerate(params):
        acc = jnp.dot(h, w.astype(jnp.bfloat16),
                      preferred_element_type=jnp.float32) + b.astype(jnp.float32)
        if layer < NUM_LAYERS - 1:
            acc = jnp.maximum(acc, LEAKY_SLOPE * acc)
            h = acc.astype(jnp.bfloat16)
        else:
            h = acc
    return h.astype(noises.dtype)


if __name__ == "__main__":
    key = jax.random.PRNGKey(0)
    key, knoise1, knoise2 = jax.random.split(key, 3)
    params = init_params(key)
    w_packed, b_packed = prepare_params(params)      # one-time prep, outside per-call path

    # Small demo batch: auto tile_m=64 -> single grid step, no row padding.
    batch = 64
    noises = jax.random.normal(knoise1, (batch, NOISE_DIM), dtype=jnp.float32)
    out = jax.block_until_ready(generator2_forward(noises, w_packed, b_packed))
    assert out.shape == (batch, FEATURE_DIM)

    ref_bf16 = reference_forward_bf16(noises, params)
    ref_f32 = reference_forward_f32(noises, params)
    assert jnp.allclose(out, ref_bf16, atol=2e-2, rtol=2e-2), \
        "Pallas output mismatch vs bf16-emulated reference"
    assert jnp.allclose(out, ref_f32, atol=1e-1, rtol=1e-1), \
        "Pallas output mismatch vs f32 reference (bf16 tolerance)"

    # Exercise the multi-tile grid path (2 parallel steps of 64 rows).
    batch2 = 128
    noises2 = jax.random.normal(knoise2, (batch2, NOISE_DIM), dtype=jnp.float32)
    out2 = jax.block_until_ready(
        generator2_forward(noises2, w_packed, b_packed, tile_m=64))
    ref2 = reference_forward_bf16(noises2, params)
    assert out2.shape == (batch2, FEATURE_DIM)
    assert jnp.allclose(out2, ref2, atol=2e-2, rtol=2e-2), \
        "Pallas multi-tile output mismatch vs bf16-emulated reference"

    print("KERNEL_OK")
</pallas_src>

<mosaic_0001>
module attributes {stable_mosaic.version = 11 : i64} {
  func.func @generator2_kernel(%arg0: i32, %arg1: memref<64x32xbf16, #tpu.memory_space<vmem>>, %arg2: memref<128x768xbf16, #tpu.memory_space<vmem>>, %arg3: memref<1x768xf32, #tpu.memory_space<vmem>>, %arg4: memref<64x48xf32, #tpu.memory_space<vmem>>) attributes {dimension_semantics = [#tpu.dimension_semantics<parallel>], iteration_bounds = array<i64: 1>, scalar_prefetch = 0 : i64, scratch_operands = 0 : i64, tpu.core_type = #tpu.core_type<tc>, window_params = [{transform_indices = @transform_0, window_bounds = array<i64: 64, 32>}, {pipeline_mode = #tpu.pipeline_mode<synchronous>, transform_indices = @transform_1, window_bounds = array<i64: 128, 768>}, {pipeline_mode = #tpu.pipeline_mode<synchronous>, transform_indices = @transform_2, window_bounds = array<i64: 1, 768>}, {transform_indices = @transform_3, window_bounds = array<i64: 64, 48>}]} {
    %c0 = arith.constant 0 : index
    %c0_0 = arith.constant 0 : index
    %0 = vector.load %arg1[%c0, %c0_0] : memref<64x32xbf16, #tpu.memory_space<vmem>>, vector<64x32xbf16>
    %c0_1 = arith.constant 0 : index
    %c0_2 = arith.constant 0 : index
    %1 = vector.load %arg2[%c0_1, %c0_2] : memref<128x768xbf16, #tpu.memory_space<vmem>>, vector<32x32xbf16>
    %c0_3 = arith.constant 0 : index
    %c0_4 = arith.constant 0 : index
    %2 = vector.load %arg3[%c0_3, %c0_4] : memref<1x768xf32, #tpu.memory_space<vmem>>, vector<1x32xf32>
    %cst = arith.constant dense<0.000000e+00> : vector<64x32xf32>
    %3 = tpu.matmul %0, %1, %cst {dimension_numbers = #tpu.dot_dimension_numbers<[1], [0], [0], [1], [0, 0, 1, 1], [], []>} : vector<64x32xbf16>, vector<32x32xbf16>, vector<64x32xf32> -> vector<64x32xf32>
    %4 = vector.broadcast %2 : vector<1x32xf32> to vector<64x32xf32>
    %5 = arith.addf %3, %4 : vector<64x32xf32>
    %cst_5 = arith.constant 2.000000e-01 : f32
    %6 = vector.broadcast %cst_5 : f32 to vector<64x32xf32>
    %7 = arith.mulf %6, %5 : vector<64x32xf32>
    %8 = arith.maximumf %5, %7 : vector<64x32xf32>
    %9 = arith.truncf %8 : vector<64x32xf32> to vector<64x32xbf16>
    %c0_6 = arith.constant 0 : index
    %c128 = arith.constant 128 : index
    %10 = vector.load %arg2[%c0_6, %c128] : memref<128x768xbf16, #tpu.memory_space<vmem>>, vector<32x64xbf16>
    %c0_7 = arith.constant 0 : index
    %c128_8 = arith.constant 128 : index
    %11 = vector.load %arg3[%c0_7, %c128_8] : memref<1x768xf32, #tpu.memory_space<vmem>>, vector<1x64xf32>
    %cst_9 = arith.constant dense<0.000000e+00> : vector<64x64xf32>
    %12 = tpu.matmul %9, %10, %cst_9 {dimension_numbers = #tpu.dot_dimension_numbers<[1], [0], [0], [1], [0, 0, 1, 1], [], []>} : vector<64x32xbf16>, vector<32x64xbf16>, vector<64x64xf32> -> vector<64x64xf32>
    %13 = vector.broadcast %11 : vector<1x64xf32> to vector<64x64xf32>
    %14 = arith.addf %12, %13 : vector<64x64xf32>
    %cst_10 = arith.constant 2.000000e-01 : f32
    %15 = vector.broadcast %cst_10 : f32 to vector<64x64xf32>
    %16 = arith.mulf %15, %14 : vector<64x64xf32>
    %17 = arith.maximumf %14, %16 : vector<64x64xf32>
    %18 = arith.truncf %17 : vector<64x64xf32> to vector<64x64xbf16>
    %c0_11 = arith.constant 0 : index
    %c256 = arith.constant 256 : index
    %19 = vector.load %arg2[%c0_11, %c256] : memref<128x768xbf16, #tpu.memory_space<vmem>>, vector<64x128xbf16>
    %c0_12 = arith.constant 0 : index
    %c256_13 = arith.constant 256 : index
    %20 = vector.load %arg3[%c0_12, %c256_13] : memref<1x768xf32, #tpu.memory_space<vmem>>, vector<1x128xf32>
    %cst_14 = arith.constant dense<0.000000e+00> : vector<64x128xf32>
    %21 = tpu.matmul %18, %19, %cst_14 {dimension_numbers = #tpu.dot_dimension_numbers<[1], [0], [0], [1], [0, 0, 1, 1], [], []>} : vector<64x64xbf16>, vector<64x128xbf16>, vector<64x128xf32> -> vector<64x128xf32>
    %22 = vector.broadcast %20 : vector<1x128xf32> to vector<64x128xf32>
    %23 = arith.addf %21, %22 : vector<64x128xf32>
    %cst_15 = arith.constant 2.000000e-01 : f32
    %24 = vector.broadcast %cst_15 : f32 to vector<64x128xf32>
    %25 = arith.mulf %24, %23 : vector<64x128xf32>
    %26 = arith.maximumf %23, %25 : vector<64x128xf32>
    %27 = arith.truncf %26 : vector<64x128xf32> to vector<64x128xbf16>
    %c0_16 = arith.constant 0 : index
    %c384 = arith.constant 384 : index
    %28 = vector.load %arg2[%c0_16, %c384] : memref<128x768xbf16, #tpu.memory_space<vmem>>, vector<128x128xbf16>
    %c0_17 = arith.constant 0 : index
    %c384_18 = arith.constant 384 : index
    %29 = vector.load %arg3[%c0_17, %c384_18] : memref<1x768xf32, #tpu.memory_space<vmem>>, vector<1x128xf32>
    %cst_19 = arith.constant dense<0.000000e+00> : vector<64x128xf32>
    %30 = tpu.matmul %27, %28, %cst_19 {dimension_numbers = #tpu.dot_dimension_numbers<[1], [0], [0], [1], [0, 0, 1, 1], [], []>} : vector<64x128xbf16>, vector<128x128xbf16>, vector<64x128xf32> -> vector<64x128xf32>
    %31 = vector.broadcast %29 : vector<1x128xf32> to vector<64x128xf32>
    %32 = arith.addf %30, %31 : vector<64x128xf32>
    %cst_20 = arith.constant 2.000000e-01 : f32
    %33 = vector.broadcast %cst_20 : f32 to vector<64x128xf32>
    %34 = arith.mulf %33, %32 : vector<64x128xf32>
    %35 = arith.maximumf %32, %34 : vector<64x128xf32>
    %36 = arith.truncf %35 : vector<64x128xf32> to vector<64x128xbf16>
    %c0_21 = arith.constant 0 : index
    %c512 = arith.constant 512 : index
    %37 = vector.load %arg2[%c0_21, %c512] : memref<128x768xbf16, #tpu.memory_space<vmem>>, vector<128x64xbf16>
    %c0_22 = arith.constant 0 : index
    %c512_23 = arith.constant 512 : index
    %38 = vector.load %arg3[%c0_22, %c512_23] : memref<1x768xf32, #tpu.memory_space<vmem>>, vector<1x64xf32>
    %cst_24 = arith.constant dense<0.000000e+00> : vector<64x64xf32>
    %39 = tpu.matmul %36, %37, %cst_24 {dimension_numbers = #tpu.dot_dimension_numbers<[1], [0], [0], [1], [0, 0, 1, 1], [], []>} : vector<64x128xbf16>, vector<128x64xbf16>, vector<64x64xf32> -> vector<64x64xf32>
    %40 = vector.broadcast %38 : vector<1x64xf32> to vector<64x64xf32>
    %41 = arith.addf %39, %40 : vector<64x64xf32>
    %cst_25 = arith.constant 2.000000e-01 : f32
    %42 = vector.broadcast %cst_25 : f32 to vector<64x64xf32>
    %43 = arith.mulf %42, %41 : vector<64x64xf32>
    %44 = arith.maximumf %41, %43 : vector<64x64xf32>
    %45 = arith.truncf %44 : vector<64x64xf32> to vector<64x64xbf16>
    %c0_26 = arith.constant 0 : index
    %c640 = arith.constant 640 : index
    %46 = vector.load %arg2[%c0_26, %c640] : memref<128x768xbf16, #tpu.memory_space<vmem>>, vector<64x48xbf16>
    %c0_27 = arith.constant 0 : index
    %c640_28 = arith.constant 640 : index
    %47 = vector.load %arg3[%c0_27, %c640_28] : memref<1x768xf32, #tpu.memory_space<vmem>>, vector<1x48xf32>
    %cst_29 = arith.constant dense<0.000000e+00> : vector<64x48xf32>
    %48 = tpu.matmul %45, %46, %cst_29 {dimension_numbers = #tpu.dot_dimension_numbers<[1], [0], [0], [1], [0, 0, 1, 1], [], []>} : vector<64x64xbf16>, vector<64x48xbf16>, vector<64x48xf32> -> vector<64x48xf32>
    %49 = vector.broadcast %47 : vector<1x48xf32> to vector<64x48xf32>
    %50 = arith.addf %48, %49 : vector<64x48xf32>
    %c0_30 = arith.constant 0 : index
    %c0_31 = arith.constant 0 : index
    %51 = vector.load %arg4[%c0_30, %c0_31] : memref<64x48xf32, #tpu.memory_space<vmem>>, vector<64x48xf32>
    tpu.vector_store %arg4[%c0_30, %c0_31], %50 {strides = array<i32>} : memref<64x48xf32, #tpu.memory_space<vmem>>, vector<64x48xf32>,
    return
  }
  func.func @transform_0(%arg0: i32) -> (i32, i32) {
    %c0_i32 = arith.constant 0 : i32
    %c0_i32_0 = arith.constant 0 : i32
    return %arg0, %c0_i32 : i32, i32
  }
  func.func @transform_1(%arg0: i32) -> (i32, i32) {
    %c0_i32 = arith.constant 0 : i32
    %c0_i32_0 = arith.constant 0 : i32
    %c0_i32_1 = arith.constant 0 : i32
    return %c0_i32, %c0_i32_0 : i32, i32
  }
  func.func @transform_2(%arg0: i32) -> (i32, i32) {
    %c0_i32 = arith.constant 0 : i32
    %c0_i32_0 = arith.constant 0 : i32
    %c0_i32_1 = arith.constant 0 : i32
    return %c0_i32, %c0_i32_0 : i32, i32
  }
  func.func @transform_3(%arg0: i32) -> (i32, i32) {
    %c0_i32 = arith.constant 0 : i32
    %c0_i32_0 = arith.constant 0 : i32
    return %arg0, %c0_i32 : i32, i32
  }
}

</mosaic_0001>

<llo_original>
// kernel: generator2_forward.1
$region0: #{generator2_forward.1}
  #allocation0 [shape = 'u32[]', space=smem, size = 0x4, offset = 0x4, fixed_abs, tag = 'smem constant byte address 0x4 - core index']
  #allocation1 [shape = 'u32[144,128]{1,0:T(1,128)}', space=vmem, size = 0x12000, scoped, tag = 'internal scratch']
  %s0 = inlined_call_operand.vmem [shape: bf16[64,32], index: 0, kind: input, shape index: {}]
  %s1 = inlined_call_operand.hbm [shape: bf16[128,768], index: 1, kind: input, shape index: {}]
  %s2 = inlined_call_operand.vmem [shape: f32[1,768], index: 2, kind: input, shape index: {}]
  %s3 = inlined_call_operand.vmem [shape: f32[64,48], index: 3, kind: output, shape index: {}]
  %s4 = sld [smem:[#allocation0]]
  $region26: #{generator2_forward.1} parent=0
    _
  %s6 = ssub.s32 1, %s4
  %s7 = scalar_select 0, %s6, %s4
  $region1: #{generator2_forward.1} parent=0
    #allocation2 [shape = 'u8[196608]{0}', space=vmem, size = 0x30000, scoped, tag = 'input window, operand 1, single buffered']
    #allocation3 [shape = 's32[1]{0}', space=sflag, size = 0x4, scoped, tag = 'scoped memory for generator2_forward.1']
    %8 = vsyncpa [#allocation3], 0
    // Predicated region
    $region2: #{generator2_forward.1} parent=1 // pred_check
      _
    $region3: #{generator2_forward.1} parent=1 // pred_check_branch
      %10 = sbr.rel (0) target = $region5
    $region4: #{generator2_forward.1} parent=1 // pred_region
      _
    $region5: #{generator2_forward.1} parent=1 // pred_fallthru
      _
    // Predicated region
    $region6: #{generator2_forward.1} parent=1 // pred_check
      _
    $region7: #{generator2_forward.1} parent=1 // pred_check_branch
      %12 = sbr.rel (0) target = $region9
    $region8: #{generator2_forward.1} parent=1 // pred_region
      %s14 = ssub.s32 6144, 6144
      %15 = vsyncadd [#allocation3], %s14
      %s16 = sshll.u32 [#allocation2], 4
      %s17 = int_to_ptr.vmem [resolvable:$true] %s16
      %22 = dma.hbm_to_vmem [thread:$0]  %s1, 6144, %s17, [#allocation3], 384, 384, 24
    $region9: #{generator2_forward.1} parent=1 // pred_fallthru
      _
    // Predicated region
    $region10: #{generator2_forward.1} parent=1 // pred_check
      _
    $region11: #{generator2_forward.1} parent=1 // pred_check_branch
      %24 = sbr.rel (0) target = $region13
    $region12: #{generator2_forward.1} parent=1 // pred_region
      _
    $region13: #{generator2_forward.1} parent=1 // pred_fallthru
      _
    // Predicated region
    $region14: #{generator2_forward.1} parent=1 // pred_check
      _
    $region15: #{generator2_forward.1} parent=1 // pred_check_branch
      %26 = sbr.rel (0) target = $region17
    $region16: #{generator2_forward.1} parent=1 // pred_region
      %27 = dma.done [#allocation3], 6144
    $region17: #{generator2_forward.1} parent=1 // pred_fallthru
      _
    %v29 = vld [vmem:[%s0] sm:$0xf]
    %v30 = vld [vmem:[%s0 + $0x4] sm:$0xf]
    %v31 = vld [vmem:[%s0 + $0x8] sm:$0xf]
    %v32 = vld [vmem:[%s0 + $0xc] sm:$0xf]
    %v33 = vld [vmem:[%s0 + $0x10] sm:$0xf]
    %v34 = vld [vmem:[%s0 + $0x14] sm:$0xf]
    %v35 = vld [vmem:[%s0 + $0x18] sm:$0xf]
    %v36 = vld [vmem:[%s0 + $0x1c] sm:$0xf]
    %v37 = vld [vmem:[#allocation2] sm:$0xf]
    %v38 = vld [vmem:[#allocation2 + $0x18] sm:$0xf]
    %v39 = vld [vmem:[#allocation2 + $0x30] sm:$0xf]
    %v40 = vld [vmem:[#allocation2 + $0x48] sm:$0xf]
    %v41 = vld [vmem:[%s2] sm:$0x1]
    %v43 = vlaneseq
    %v44 = vshrl.u32 %v43, 7
    %v45 = vsub.s32 0, %v44
    %v46 = vrot.slane %v41, %v45
    %v56 = vunpack.c.l.b16 %v29
    %v57 = vunpack.c.l.b16 %v30
    %v58 = vunpack.c.l.b16 %v31
    %v59 = vunpack.c.l.b16 %v32
    %v60 = vunpack.c.l.b16 %v33
    %v61 = vunpack.c.l.b16 %v34
    %v62 = vunpack.c.l.b16 %v35
    %v63 = vunpack.c.l.b16 %v36
    %v64 = vpack.c.b16 %v57, %v56
    %v65 = vpack.c.b16 %v59, %v58
    %v66 = vpack.c.b16 %v61, %v60
    %v67 = vpack.c.b16 %v63, %v62
    %v72 = vunpack.c.l.b16 %v37
    %v73 = vunpack.c.l.b16 %v38
    %v74 = vunpack.c.l.b16 %v39
    %v75 = vunpack.c.l.b16 %v40
    %v76 = vpack.c.b16 %v73, %v72
    %v77 = vpack.c.b16 %v75, %v74
    %vm80 = vcmask 261120
    %v82 = vsel %vm80, %v64, 0
    %v85 = vsel %vm80, %v65, 0
    %v88 = vsel %vm80, %v66, 0
    %v91 = vsel %vm80, %v67, 0
    %93 = vmatprep.subr.bf16.mxu0 0
    %94 = vmatpush1.bf16.msra.mxu0 %v76
    %95 = vmatprep.subr.bf16.mxu0 0
    %96 = vmatpush1.bf16.msra.mxu0 %v77
    %97 = vmatprep.subr.bf16.mxu0 0
    %98 = vmatpush1.bf16.msra.mxu0 0
    %99 = vmatprep.subr.bf16.mxu0 0
    %100 = vmatpush1.bf16.msra.mxu0 0
    %101 = vmatprep.subr.bf16.mxu0 0
    %102 = vmatpush1.bf16.msra.mxu0 0
    %103 = vmatprep.subr.bf16.mxu0 0
    %104 = vmatpush1.bf16.msra.mxu0 0
    %105 = vmatprep.subr.bf16.mxu0 0
    %106 = vmatpush1.bf16.msra.mxu0 0
    %107 = vmatprep.subr.bf16.mxu0 0
    %108 = vmatpush1.bf16.msra.mxu0 0
    %109 = vmatprep.subr.bf16.mxu0 0
    %110 = vmatpush1.bf16.msra.mxu0 0
    %111 = vmatprep.subr.bf16.mxu0 0
    %112 = vmatpush1.bf16.msra.mxu0 0
    %113 = vmatprep.subr.bf16.mxu0 0
    %114 = vmatpush1.bf16.msra.mxu0 0
    %115 = vmatprep.subr.bf16.mxu0 0
    %116 = vmatpush1.bf16.msra.mxu0 0
    %117 = vmatprep.subr.bf16.mxu0 0
    %118 = vmatpush1.bf16.msra.mxu0 0
    %119 = vmatprep.subr.bf16.mxu0 0
    %120 = vmatpush1.bf16.msra.mxu0 0
    %121 = vmatprep.subr.bf16.mxu0 0
    %122 = vmatpush1.bf16.msra.mxu0 0
    %123 = vmatprep.subr.bf16.mxu0 0
    %124 = vmatpush1.bf16.msra.mxu0 0
    %125 = vmatprep.mubr.bf16.mxu0 0
    %126 = vmatmul.mubr.bf16.gmra.mrb[0].mxu0 %v82
    %v127 = vpop.f32.mrb[0].mxu0
    %v128 = vadd.f32 %v46, %v127
    %v129 = vpop.f32.mrb[0].mxu0
    %v130 = vpop.f32.mrb[0].mxu0
    %v131 = vadd.f32 %v46, %v130
    %v132 = vpop.f32.mrb[0].mxu0
    %133 = vmatprep.mubr.bf16.mxu0 0
    %134 = vmatmul.mubr.bf16.gmra.mrb[0].mxu0 %v85
    %v135 = vpop.f32.mrb[0].mxu0
    %v136 = vadd.f32 %v46, %v135
    %v137 = vpop.f32.mrb[0].mxu0
    %v138 = vpop.f32.mrb[0].mxu0
    %v139 = vadd.f32 %v46, %v138
    %v140 = vpop.f32.mrb[0].mxu0
    %141 = vmatprep.mubr.bf16.mxu0 0
    %142 = vmatmul.mubr.bf16.gmra.mrb[0].mxu0 %v88
    %v143 = vpop.f32.mrb[0].mxu0
    %v144 = vadd.f32 %v46, %v143
    %v145 = vpop.f32.mrb[0].mxu0
    %v146 = vpop.f32.mrb[0].mxu0
    %v147 = vadd.f32 %v46, %v146
    %v148 = vpop.f32.mrb[0].mxu0
    %149 = vmatprep.mubr.bf16.mxu0 0
    %150 = vmatmul.mubr.bf16.gmra.mrb[0].mxu0 %v91
    %v151 = vpop.f32.mrb[0].mxu0
    %v152 = vadd.f32 %v46, %v151
    %v153 = vpop.f32.mrb[0].mxu0
    %v154 = vpop.f32.mrb[0].mxu0
    %v155 = vadd.f32 %v46, %v154
    %v156 = vpop.f32.mrb[0].mxu0
    %157 = vdwg.mxu0
    %v158 = vmul.f32 %v128, 0.2
    %v159 = vmul.f32 %v131, 0.2
    %v160 = vmul.f32 %v136, 0.2
    %v161 = vmul.f32 %v139, 0.2
    %v162 = vmul.f32 %v144, 0.2
    %v163 = vmul.f32 %v147, 0.2
    %v164 = vmul.f32 %v152, 0.2
    %v165 = vmul.f32 %v155, 0.2
    %v166 = vmax.f32 %v128, %v158
    %v167 = vmax.f32 %v131, %v159
    %v168 = vmax.f32 %v136, %v160
    %v169 = vmax.f32 %v139, %v161
    %v170 = vmax.f32 %v144, %v162
    %v171 = vmax.f32 %v147, %v163
    %v172 = vmax.f32 %v152, %v164
    %v173 = vmax.f32 %v155, %v165
    %v174 = vpack.c.bf16 %v167, %v166
    %v175 = vpack.c.bf16 %v169, %v168
    %v176 = vpack.c.bf16 %v171, %v170
    %v177 = vpack.c.bf16 %v173, %v172
    %v178 = vld [vmem:[#allocation2 + $0x4] sm:$0xf]
    %v179 = vld [vmem:[#allocation2 + $0x1c] sm:$0xf]
    %v180 = vld [vmem:[#allocation2 + $0x34] sm:$0xf]
    %v181 = vld [vmem:[#allocation2 + $0x4c] sm:$0xf]
    %v182 = vld [vmem:[%s2 + $0x1] sm:$0x1]
    %v184 = vlaneseq
    %v185 = vshrl.u32 %v184, 7
    %v186 = vsub.s32 0, %v185
    %v187 = vrot.slane %v182, %v186
    %v193 = vunpack.c.l.b16 %v178
    %v194 = vunpack.c.l.b16 %v179
    %v195 = vunpack.c.l.b16 %v180
    %v196 = vunpack.c.l.b16 %v181
    %v197 = vpack.c.b16 %v194, %v193
    %v198 = vpack.c.b16 %v196, %v195
    %v202 = vsel %vm80, %v174, 0
    %v205 = vsel %vm80, %v175, 0
    %v208 = vsel %vm80, %v176, 0
    %v211 = vsel %vm80, %v177, 0
    %213 = vmatprep.subr.bf16.mxu0 0
    %214 = vmatpush1.bf16.msra.mxu0 %v197
    %215 = vmatprep.subr.bf16.mxu0 0
    %216 = vmatpush1.bf16.msra.mxu0 %v198
    %217 = vmatprep.subr.bf16.mxu0 0
    %218 = vmatpush1.bf16.msra.mxu0 0
    %219 = vmatprep.subr.bf16.mxu0 0
    %220 = vmatpush1.bf16.msra.mxu0 0
    %221 = vmatprep.subr.bf16.mxu0 0
    %222 = vmatpush1.bf16.msra.mxu0 0
    %223 = vmatprep.subr.bf16.mxu0 0
    %224 = vmatpush1.bf16.msra.mxu0 0
    %225 = vmatprep.subr.bf16.mxu0 0
    %226 = vmatpush1.bf16.msra.mxu0 0
    %227 = vmatprep.subr.bf16.mxu0 0
    %228 = vmatpush1.bf16.msra.mxu0 0
    %229 = vmatprep.subr.bf16.mxu0 0
    %230 = vmatpush1.bf16.msra.mxu0 0
    %231 = vmatprep.subr.bf16.mxu0 0
    %232 = vmatpush1.bf16.msra.mxu0 0
    %233 = vmatprep.subr.bf16.mxu0 0
    %234 = vmatpush1.bf16.msra.mxu0 0
    %235 = vmatprep.subr.bf16.mxu0 0
    %236 = vmatpush1.bf16.msra.mxu0 0
    %237 = vmatprep.subr.bf16.mxu0 0
    %238 = vmatpush1.bf16.msra.mxu0 0
    %239 = vmatprep.subr.bf16.mxu0 0
    %240 = vmatpush1.bf16.msra.mxu0 0
    %241 = vmatprep.subr.bf16.mxu0 0
    %242 = vmatpush1.bf16.msra.mxu0 0
    %243 = vmatprep.subr.bf16.mxu0 0
    %244 = vmatpush1.bf16.msra.mxu0 0
    %245 = vmatprep.mubr.bf16.mxu0 0
    %246 = vmatmul.mubr.bf16.gmra.mrb[0].mxu0 %v202
    %v247 = vpop.f32.mrb[0].mxu0
    %v248 = vadd.f32 %v187, %v247
    %v249 = vpop.f32.mrb[0].mxu0
    %v250 = vpop.f32.mrb[0].mxu0
    %v251 = vadd.f32 %v187, %v250
    %v252 = vpop.f32.mrb[0].mxu0
    %253 = vmatprep.mubr.bf16.mxu0 0
    %254 = vmatmul.mubr.bf16.gmra.mrb[0].mxu0 %v205
    %v255 = vpop.f32.mrb[0].mxu0
    %v256 = vadd.f32 %v187, %v255
    %v257 = vpop.f32.mrb[0].mxu0
    %v258 = vpop.f32.mrb[0].mxu0
    %v259 = vadd.f32 %v187, %v258
    %v260 = vpop.f32.mrb[0].mxu0
    %261 = vmatprep.mubr.bf16.mxu0 0
    %262 = vmatmul.mubr.bf16.gmra.mrb[0].mxu0 %v208
    %v263 = vpop.f32.mrb[0].mxu0
    %v264 = vadd.f32 %v187, %v263
    %v265 = vpop.f32.mrb[0].mxu0
    %v266 = vpop.f32.mrb[0].mxu0
    %v267 = vadd.f32 %v187, %v266
    %v268 = vpop.f32.mrb[0].mxu0
    %269 = vmatprep.mubr.bf16.mxu0 0
    %270 = vmatmul.mubr.bf16.gmra.mrb[0].mxu0 %v211
    %v271 = vpop.f32.mrb[0].mxu0
    %v272 = vadd.f32 %v187, %v271
    %v273 = vpop.f32.mrb[0].mxu0
    %v274 = vpop.f32.mrb[0].mxu0
    %v275 = vadd.f32 %v187, %v274
    %v276 = vpop.f32.mrb[0].mxu0
    %277 = vdwg.mxu0
    %v278 = vmul.f32 %v248, 0.2
    %v279 = vmul.f32 %v251, 0.2
    %v280 = vmul.f32 %v256, 0.2
    %v281 = vmul.f32 %v259, 0.2
    %v282 = vmul.f32 %v264, 0.2
    %v283 = vmul.f32 %v267, 0.2
    %v284 = vmul.f32 %v272, 0.2
    %v285 = vmul.f32 %v275, 0.2
    %v286 = vmax.f32 %v248, %v278
    %v287 = vmax.f32 %v251, %v279
    %v288 = vmax.f32 %v256, %v280
    %v289 = vmax.f32 %v259, %v281
    %v290 = vmax.f32 %v264, %v282
    %v291 = vmax.f32 %v267, %v283
    %v292 = vmax.f32 %v272, %v284
    %v293 = vmax.f32 %v275, %v285
    %v294 = vpack.c.bf16 %v287, %v286
    %v295 = vpack.c.bf16 %v289, %v288
    %v296 = vpack.c.bf16 %v291, %v290
    %v297 = vpack.c.bf16 %v293, %v292
    %v298 = vld [vmem:[#allocation2 + $0x8] sm:$0xf]
    %v299 = vld [vmem:[#allocation2 + $0x20] sm:$0xf]
    %v300 = vld [vmem:[#allocation2 + $0x38] sm:$0xf]
    %v301 = vld [vmem:[#allocation2 + $0x50] sm:$0xf]
    %v302 = vld [vmem:[#allocation2 + $0x68] sm:$0xf]
    %v303 = vld [vmem:[#allocation2 + $0x80] sm:$0xf]
    %v304 = vld [vmem:[#allocation2 + $0x98] sm:$0xf]
    %v305 = vld [vmem:[#allocation2 + $0xb0] sm:$0xf]
    %v306 = vld [vmem:[%s2 + $0x2] sm:$0x1]
    %v308 = vlaneseq
    %v309 = vshrl.u32 %v308, 7
    %v310 = vsub.s32 0, %v309
    %v311 = vrot.slane %v306, %v310
    %v321 = vunpack.c.l.b16 %v298
    %v322 = vunpack.c.l.b16 %v299
    %v323 = vunpack.c.l.b16 %v300
    %v324 = vunpack.c.l.b16 %v301
    %v325 = vunpack.c.l.b16 %v302
    %v326 = vunpack.c.l.b16 %v303
    %v327 = vunpack.c.l.b16 %v304
    %v328 = vunpack.c.l.b16 %v305
    %v329 = vpack.c.b16 %v322, %v321
    %v330 = vpack.c.b16 %v324, %v323
    %v331 = vpack.c.b16 %v326, %v325
    %v332 = vpack.c.b16 %v328, %v327
    %vm337 = vcmask 523264
    %v339 = vsel %vm337, %v294, 0
    %v342 = vsel %vm337, %v295, 0
    %v345 = vsel %vm337, %v296, 0
    %v348 = vsel %vm337, %v297, 0
    %350 = vmatprep.subr.bf16.mxu0 0
    %351 = vmatpush1.bf16.msra.mxu0 %v329
    %352 = vmatprep.subr.bf16.mxu0 0
    %353 = vmatpush1.bf16.msra.mxu0 %v330
    %354 = vmatprep.subr.bf16.mxu0 0
    %355 = vmatpush1.bf16.msra.mxu0 %v331
    %356 = vmatprep.subr.bf16.mxu0 0
    %357 = vmatpush1.bf16.msra.mxu0 %v332
    %358 = vmatprep.subr.bf16.mxu0 0
    %359 = vmatpush1.bf16.msra.mxu0 0
    %360 = vmatprep.subr.bf16.mxu0 0
    %361 = vmatpush1.bf16.msra.mxu0 0
    %362 = vmatprep.subr.bf16.mxu0 0
    %363 = vmatpush1.bf16.msra.mxu0 0
    %364 = vmatprep.subr.bf16.mxu0 0
    %365 = vmatpush1.bf16.msra.mxu0 0
    %366 = vmatprep.subr.bf16.mxu0 0
    %367 = vmatpush1.bf16.msra.mxu0 0
    %368 = vmatprep.subr.bf16.mxu0 0
    %369 = vmatpush1.bf16.msra.mxu0 0
    %370 = vmatprep.subr.bf16.mxu0 0
    %371 = vmatpush1.bf16.msra.mxu0 0
    %372 = vmatprep.subr.bf16.mxu0 0
    %373 = vmatpush1.bf16.msra.mxu0 0
    %374 = vmatprep.subr.bf16.mxu0 0
    %375 = vmatpush1.bf16.msra.mxu0 0
    %376 = vmatprep.subr.bf16.mxu0 0
    %377 = vmatpush1.bf16.msra.mxu0 0
    %378 = vmatprep.subr.bf16.mxu0 0
    %379 = vmatpush1.bf16.msra.mxu0 0
    %380 = vmatprep.subr.bf16.mxu0 0
    %381 = vmatpush1.bf16.msra.mxu0 0
    %382 = vmatprep.mubr.bf16.mxu0 0
    %383 = vmatmul.mubr.bf16.gmra.mrb[0].mxu0 %v339
    %v384 = vpop.f32.mrb[0].mxu0
    %v385 = vadd.f32 %v311, %v384
    %v386 = vpop.f32.mrb[0].mxu0
    %v387 = vpop.f32.mrb[0].mxu0
    %v388 = vadd.f32 %v311, %v387
    %v389 = vpop.f32.mrb[0].mxu0
    %390 = vmatprep.mubr.bf16.mxu0 0
    %391 = vmatmul.mubr.bf16.gmra.mrb[0].mxu0 %v342
    %v392 = vpop.f32.mrb[0].mxu0
    %v393 = vadd.f32 %v311, %v392
    %v394 = vpop.f32.mrb[0].mxu0
    %v395 = vpop.f32.mrb[0].mxu0
    %v396 = vadd.f32 %v311, %v395
    %v397 = vpop.f32.mrb[0].mxu0
    %398 = vmatprep.mubr.bf16.mxu0 0
    %399 = vmatmul.mubr.bf16.gmra.mrb[0].mxu0 %v345
    %v400 = vpop.f32.mrb[0].mxu0
    %v401 = vadd.f32 %v311, %v400
    %v402 = vpop.f32.mrb[0].mxu0
    %v403 = vpop.f32.mrb[0].mxu0
    %v404 = vadd.f32 %v311, %v403
    %v405 = vpop.f32.mrb[0].mxu0
    %406 = vmatprep.mubr.bf16.mxu0 0
    %407 = vmatmul.mubr.bf16.gmra.mrb[0].mxu0 %v348
    %v408 = vpop.f32.mrb[0].mxu0
    %v409 = vadd.f32 %v311, %v408
    %v410 = vpop.f32.mrb[0].mxu0
    %v411 = vpop.f32.mrb[0].mxu0
    %v412 = vadd.f32 %v311, %v411
    %v413 = vpop.f32.mrb[0].mxu0
    %414 = vdwg.mxu0
    %v415 = vmul.f32 %v385, 0.2
    %v416 = vmul.f32 %v388, 0.2
    %v417 = vmul.f32 %v393, 0.2
    %v418 = vmul.f32 %v396, 0.2
    %v419 = vmul.f32 %v401, 0.2
    %v420 = vmul.f32 %v404, 0.2
    %v421 = vmul.f32 %v409, 0.2
    %v422 = vmul.f32 %v412, 0.2
    %v423 = vmax.f32 %v385, %v415
    %v424 = vmax.f32 %v388, %v416
    %v425 = vmax.f32 %v393, %v417
    %v426 = vmax.f32 %v396, %v418
    %v427 = vmax.f32 %v401, %v419
    %v428 = vmax.f32 %v404, %v420
    %v429 = vmax.f32 %v409, %v421
    %v430 = vmax.f32 %v412, %v422
    %v431 = vpack.c.bf16 %v424, %v423
    %v432 = vpack.c.bf16 %v426, %v425
    %v433 = vpack.c.bf16 %v428, %v427
    %v434 = vpack.c.bf16 %v430, %v429
    %v435 = vld [vmem:[#allocation2 + $0xc] sm:$0xf]
    %v436 = vld [vmem:[#allocation2 + $0x24] sm:$0xf]
    %v437 = vld [vmem:[#allocation2 + $0x3c] sm:$0xf]
    %v438 = vld [vmem:[#allocation2 + $0x54] sm:$0xf]
    %v439 = vld [vmem:[#allocation2 + $0x6c] sm:$0xf]
    %v440 = vld [vmem:[#allocation2 + $0x84] sm:$0xf]
    %v441 = vld [vmem:[#allocation2 + $0x9c] sm:$0xf]
    %v442 = vld [vmem:[#allocation2 + $0xb4] sm:$0xf]
    %v443 = vld [vmem:[#allocation2 + $0xcc] sm:$0xf]
    %v444 = vld [vmem:[#allocation2 + $0xe4] sm:$0xf]
    %v445 = vld [vmem:[#allocation2 + $0xfc] sm:$0xf]
    %v446 = vld [vmem:[#allocation2 + $0x114] sm:$0xf]
    %v447 = vld [vmem:[#allocation2 + $0x12c] sm:$0xf]
    %v448 = vld [vmem:[#allocation2 + $0x144] sm:$0xf]
    %v449 = vld [vmem:[#allocation2 + $0x15c] sm:$0xf]
    %v450 = vld [vmem:[#allocation2 + $0x174] sm:$0xf]
    %v451 = vld [vmem:[%s2 + $0x3] sm:$0x1]
    %v453 = vlaneseq
    %v454 = vshrl.u32 %v453, 7
    %v455 = vsub.s32 0, %v454
    %v456 = vrot.slane %v451, %v455
    %v474 = vunpack.c.l.b16 %v435
    %v475 = vunpack.c.l.b16 %v436
    %v476 = vunpack.c.l.b16 %v437
    %v477 = vunpack.c.l.b16 %v438
    %v478 = vunpack.c.l.b16 %v439
    %v479 = vunpack.c.l.b16 %v440
    %v480 = vunpack.c.l.b16 %v441
    %v481 = vunpack.c.l.b16 %v442
    %v482 = vunpack.c.l.b16 %v443
    %v483 = vunpack.c.l.b16 %v444
    %v484 = vunpack.c.l.b16 %v445
    %v485 = vunpack.c.l.b16 %v446
    %v486 = vunpack.c.l.b16 %v447
    %v487 = vunpack.c.l.b16 %v448
    %v488 = vunpack.c.l.b16 %v449
    %v489 = vunpack.c.l.b16 %v450
    %v490 = vpack.c.b16 %v475, %v474
    %v491 = vpack.c.b16 %v477, %v476
    %v492 = vpack.c.b16 %v479, %v478
    %v493 = vpack.c.b16 %v481, %v480
    %v494 = vpack.c.b16 %v483, %v482
    %v495 = vpack.c.b16 %v485, %v484
    %v496 = vpack.c.b16 %v487, %v486
    %v497 = vpack.c.b16 %v489, %v488
    %506 = vmatprep.subr.bf16.mxu0 0
    %507 = vmatpush1.bf16.msra.mxu0 %v490
    %508 = vmatprep.subr.bf16.mxu0 0
    %509 = vmatpush1.bf16.msra.mxu0 %v491
    %510 = vmatprep.subr.bf16.mxu0 0
    %511 = vmatpush1.bf16.msra.mxu0 %v492
    %512 = vmatprep.subr.bf16.mxu0 0
    %513 = vmatpush1.bf16.msra.mxu0 %v493
    %514 = vmatprep.subr.bf16.mxu0 0
    %515 = vmatpush1.bf16.msra.mxu0 %v494
    %516 = vmatprep.subr.bf16.mxu0 0
    %517 = vmatpush1.bf16.msra.mxu0 %v495
    %518 = vmatprep.subr.bf16.mxu0 0
    %519 = vmatpush1.bf16.msra.mxu0 %v496
    %520 = vmatprep.subr.bf16.mxu0 0
    %521 = vmatpush1.bf16.msra.mxu0 %v497
    %522 = vmatprep.subr.bf16.mxu0 0
    %523 = vmatpush1.bf16.msra.mxu0 0
    %524 = vmatprep.subr.bf16.mxu0 0
    %525 = vmatpush1.bf16.msra.mxu0 0
    %526 = vmatprep.subr.bf16.mxu0 0
    %527 = vmatpush1.bf16.msra.mxu0 0
    %528 = vmatprep.subr.bf16.mxu0 0
    %529 = vmatpush1.bf16.msra.mxu0 0
    %530 = vmatprep.subr.bf16.mxu0 0
    %531 = vmatpush1.bf16.msra.mxu0 0
    %532 = vmatprep.subr.bf16.mxu0 0
    %533 = vmatpush1.bf16.msra.mxu0 0
    %534 = vmatprep.subr.bf16.mxu0 0
    %535 = vmatpush1.bf16.msra.mxu0 0
    %536 = vmatprep.subr.bf16.mxu0 0
    %537 = vmatpush1.bf16.msra.mxu0 0
    %538 = vmatprep.mubr.bf16.mxu0 0
    %539 = vmatmul.mubr.bf16.gmra.mrb[0].mxu0 %v431
    %v540 = vpop.f32.mrb[0].mxu0
    %v541 = vadd.f32 %v456, %v540
    %v542 = vpop.f32.mrb[0].mxu0
    %v543 = vpop.f32.mrb[0].mxu0
    %v544 = vadd.f32 %v456, %v543
    %v545 = vpop.f32.mrb[0].mxu0
    %546 = vmatprep.mubr.bf16.mxu0 0
    %547 = vmatmul.mubr.bf16.gmra.mrb[0].mxu0 %v432
    %v548 = vpop.f32.mrb[0].mxu0
    %v549 = vadd.f32 %v456, %v548
    %v550 = vpop.f32.mrb[0].mxu0
    %v551 = vpop.f32.mrb[0].mxu0
    %v552 = vadd.f32 %v456, %v551
    %v553 = vpop.f32.mrb[0].mxu0
    %554 = vmatprep.mubr.bf16.mxu0 0
    %555 = vmatmul.mubr.bf16.gmra.mrb[0].mxu0 %v433
    %v556 = vpop.f32.mrb[0].mxu0
    %v557 = vadd.f32 %v456, %v556
    %v558 = vpop.f32.mrb[0].mxu0
    %v559 = vpop.f32.mrb[0].mxu0
    %v560 = vadd.f32 %v456, %v559
    %v561 = vpop.f32.mrb[0].mxu0
    %562 = vmatprep.mubr.bf16.mxu0 0
    %563 = vmatmul.mubr.bf16.gmra.mrb[0].mxu0 %v434
    %v564 = vpop.f32.mrb[0].mxu0
    %v565 = vadd.f32 %v456, %v564
    %v566 = vpop.f32.mrb[0].mxu0
    %v567 = vpop.f32.mrb[0].mxu0
    %v568 = vadd.f32 %v456, %v567
    %v569 = vpop.f32.mrb[0].mxu0
    %570 = vdwg.mxu0
    %v571 = vmul.f32 %v541, 0.2
    %v572 = vmul.f32 %v544, 0.2
    %v573 = vmul.f32 %v549, 0.2
    %v574 = vmul.f32 %v552, 0.2
    %v575 = vmul.f32 %v557, 0.2
    %v576 = vmul.f32 %v560, 0.2
    %v577 = vmul.f32 %v565, 0.2
    %v578 = vmul.f32 %v568, 0.2
    %v579 = vmax.f32 %v541, %v571
    %v580 = vmax.f32 %v544, %v572
    %v581 = vmax.f32 %v549, %v573
    %v582 = vmax.f32 %v552, %v574
    %v583 = vmax.f32 %v557, %v575
    %v584 = vmax.f32 %v560, %v576
    %v585 = vmax.f32 %v565, %v577
    %v586 = vmax.f32 %v568, %v578
    %v587 = vpack.c.bf16 %v580, %v579
    %v588 = vpack.c.bf16 %v582, %v581
    %v589 = vpack.c.bf16 %v584, %v583
    %v590 = vpack.c.bf16 %v586, %v585
    %v591 = vld [vmem:[#allocation2 + $0x10] sm:$0xf]
    %v592 = vld [vmem:[#allocation2 + $0x28] sm:$0xf]
    %v593 = vld [vmem:[#allocation2 + $0x40] sm:$0xf]
    %v594 = vld [vmem:[#allocation2 + $0x58] sm:$0xf]
    %v595 = vld [vmem:[#allocation2 + $0x70] sm:$0xf]
    %v596 = vld [vmem:[#allocation2 + $0x88] sm:$0xf]
    %v597 = vld [vmem:[#allocation2 + $0xa0] sm:$0xf]
    %v598 = vld [vmem:[#allocation2 + $0xb8] sm:$0xf]
    %v599 = vld [vmem:[#allocation2 + $0xd0] sm:$0xf]
    %v600 = vld [vmem:[#allocation2 + $0xe8] sm:$0xf]
    %v601 = vld [vmem:[#allocation2 + $0x100] sm:$0xf]
    %v602 = vld [vmem:[#allocation2 + $0x118] sm:$0xf]
    %v603 = vld [vmem:[#allocation2 + $0x130] sm:$0xf]
    %v604 = vld [vmem:[#allocation2 + $0x148] sm:$0xf]
    %v605 = vld [vmem:[#allocation2 + $0x160] sm:$0xf]
    %v606 = vld [vmem:[#allocation2 + $0x178] sm:$0xf]
    %v607 = vld [vmem:[%s2 + $0x4] sm:$0x1]
    %v609 = vlaneseq
    %v610 = vshrl.u32 %v609, 7
    %v611 = vsub.s32 0, %v610
    %v612 = vrot.slane %v607, %v611
    %v630 = vunpack.c.l.b16 %v591
    %v631 = vunpack.c.l.b16 %v592
    %v632 = vunpack.c.l.b16 %v593
    %v633 = vunpack.c.l.b16 %v594
    %v634 = vunpack.c.l.b16 %v595
    %v635 = vunpack.c.l.b16 %v596
    %v636 = vunpack.c.l.b16 %v597
    %v637 = vunpack.c.l.b16 %v598
    %v638 = vunpack.c.l.b16 %v599
    %v639 = vunpack.c.l.b16 %v600
    %v640 = vunpack.c.l.b16 %v601
    %v641 = vunpack.c.l.b16 %v602
    %v642 = vunpack.c.l.b16 %v603
    %v643 = vunpack.c.l.b16 %v604
    %v644 = vunpack.c.l.b16 %v605
    %v645 = vunpack.c.l.b16 %v606
    %v646 = vpack.c.b16 %v631, %v630
    %v647 = vpack.c.b16 %v633, %v632
    %v648 = vpack.c.b16 %v635, %v634
    %v649 = vpack.c.b16 %v637, %v636
    %v650 = vpack.c.b16 %v639, %v638
    %v651 = vpack.c.b16 %v641, %v640
    %v652 = vpack.c.b16 %v643, %v642
    %v653 = vpack.c.b16 %v645, %v644
    %662 = vmatprep.subr.bf16.mxu0 0
    %663 = vmatpush1.bf16.msra.mxu0 %v646
    %664 = vmatprep.subr.bf16.mxu0 0
    %665 = vmatpush1.bf16.msra.mxu0 %v647
    %666 = vmatprep.subr.bf16.mxu0 0
    %667 = vmatpush1.bf16.msra.mxu0 %v648
    %668 = vmatprep.subr.bf16.mxu0 0
    %669 = vmatpush1.bf16.msra.mxu0 %v649
    %670 = vmatprep.subr.bf16.mxu0 0
    %671 = vmatpush1.bf16.msra.mxu0 %v650
    %672 = vmatprep.subr.bf16.mxu0 0
    %673 = vmatpush1.bf16.msra.mxu0 %v651
    %674 = vmatprep.subr.bf16.mxu0 0
    %675 = vmatpush1.bf16.msra.mxu0 %v652
    %676 = vmatprep.subr.bf16.mxu0 0
    %677 = vmatpush1.bf16.msra.mxu0 %v653
    %678 = vmatprep.subr.bf16.mxu0 0
    %679 = vmatpush1.bf16.msra.mxu0 0
    %680 = vmatprep.subr.bf16.mxu0 0
    %681 = vmatpush1.bf16.msra.mxu0 0
    %682 = vmatprep.subr.bf16.mxu0 0
    %683 = vmatpush1.bf16.msra.mxu0 0
    %684 = vmatprep.subr.bf16.mxu0 0
    %685 = vmatpush1.bf16.msra.mxu0 0
    %686 = vmatprep.subr.bf16.mxu0 0
    %687 = vmatpush1.bf16.msra.mxu0 0
    %688 = vmatprep.subr.bf16.mxu0 0
    %689 = vmatpush1.bf16.msra.mxu0 0
    %690 = vmatprep.subr.bf16.mxu0 0
    %691 = vmatpush1.bf16.msra.mxu0 0
    %692 = vmatprep.subr.bf16.mxu0 0
    %693 = vmatpush1.bf16.msra.mxu0 0
    %694 = vmatprep.mubr.bf16.mxu0 0
    %695 = vmatmul.mubr.bf16.gmra.mrb[0].mxu0 %v587
    %v696 = vpop.f32.mrb[0].mxu0
    %v697 = vadd.f32 %v612, %v696
    %v698 = vpop.f32.mrb[0].mxu0
    %v699 = vpop.f32.mrb[0].mxu0
    %v700 = vadd.f32 %v612, %v699
    %v701 = vpop.f32.mrb[0].mxu0
    %702 = vmatprep.mubr.bf16.mxu0 0
    %703 = vmatmul.mubr.bf16.gmra.mrb[0].mxu0 %v588
    %v704 = vpop.f32.mrb[0].mxu0
    %v705 = vadd.f32 %v612, %v704
    %v706 = vpop.f32.mrb[0].mxu0
    %v707 = vpop.f32.mrb[0].mxu0
    %v708 = vadd.f32 %v612, %v707
    %v709 = vpop.f32.mrb[0].mxu0
    %710 = vmatprep.mubr.bf16.mxu0 0
    %711 = vmatmul.mubr.bf16.gmra.mrb[0].mxu0 %v589
    %v712 = vpop.f32.mrb[0].mxu0
    %v713 = vadd.f32 %v612, %v712
    %v714 = vpop.f32.mrb[0].mxu0
    %v715 = vpop.f32.mrb[0].mxu0
    %v716 = vadd.f32 %v612, %v715
    %v717 = vpop.f32.mrb[0].mxu0
    %718 = vmatprep.mubr.bf16.mxu0 0
    %719 = vmatmul.mubr.bf16.gmra.mrb[0].mxu0 %v590
    %v720 = vpop.f32.mrb[0].mxu0
    %v721 = vadd.f32 %v612, %v720
    %v722 = vpop.f32.mrb[0].mxu0
    %v723 = vpop.f32.mrb[0].mxu0
    %v724 = vadd.f32 %v612, %v723
    %v725 = vpop.f32.mrb[0].mxu0
    %726 = vdwg.mxu0
    %v727 = vmul.f32 %v697, 0.2
    %v728 = vmul.f32 %v700, 0.2
    %v729 = vmul.f32 %v705, 0.2
    %v730 = vmul.f32 %v708, 0.2
    %v731 = vmul.f32 %v713, 0.2
    %v732 = vmul.f32 %v716, 0.2
    %v733 = vmul.f32 %v721, 0.2
    %v734 = vmul.f32 %v724, 0.2
    %v735 = vmax.f32 %v697, %v727
    %v736 = vmax.f32 %v700, %v728
    %v737 = vmax.f32 %v705, %v729
    %v738 = vmax.f32 %v708, %v730
    %v739 = vmax.f32 %v713, %v731
    %v740 = vmax.f32 %v716, %v732
    %v741 = vmax.f32 %v721, %v733
    %v742 = vmax.f32 %v724, %v734
    %v743 = vpack.c.bf16 %v736, %v735
    %v744 = vpack.c.bf16 %v738, %v737
    %v745 = vpack.c.bf16 %v740, %v739
    %v746 = vpack.c.bf16 %v742, %v741
    %v747 = vld [vmem:[#allocation2 + $0x14] sm:$0xf]
    %v748 = vld [vmem:[#allocation2 + $0x2c] sm:$0xf]
    %v749 = vld [vmem:[#allocation2 + $0x44] sm:$0xf]
    %v750 = vld [vmem:[#allocation2 + $0x5c] sm:$0xf]
    %v751 = vld [vmem:[#allocation2 + $0x74] sm:$0xf]
    %v752 = vld [vmem:[#allocation2 + $0x8c] sm:$0xf]
    %v753 = vld [vmem:[#allocation2 + $0xa4] sm:$0xf]
    %v754 = vld [vmem:[#allocation2 + $0xbc] sm:$0xf]
    %v755 = vld [vmem:[%s2 + $0x5] sm:$0x1]
    %v757 = vlaneseq
    %v758 = vshrl.u32 %v757, 7
    %v759 = vsub.s32 0, %v758
    %v760 = vrot.slane %v755, %v759
    %v770 = vunpack.c.l.b16 %v747
    %v771 = vunpack.c.l.b16 %v748
    %v772 = vunpack.c.l.b16 %v749
    %v773 = vunpack.c.l.b16 %v750
    %v774 = vunpack.c.l.b16 %v751
    %v775 = vunpack.c.l.b16 %v752
    %v776 = vunpack.c.l.b16 %v753
    %v777 = vunpack.c.l.b16 %v754
    %v778 = vpack.c.b16 %v771, %v770
    %v779 = vpack.c.b16 %v773, %v772
    %v780 = vpack.c.b16 %v775, %v774
    %v781 = vpack.c.b16 %v777, %v776
    %v787 = vsel %vm337, %v743, 0
    %v790 = vsel %vm337, %v744, 0
    %v793 = vsel %vm337, %v745, 0
    %v796 = vsel %vm337, %v746, 0
    %798 = vmatprep.subr.bf16.mxu0 0
    %799 = vmatpush1.bf16.msra.mxu0 %v778
    %800 = vmatprep.subr.bf16.mxu0 0
    %801 = vmatpush1.bf16.msra.mxu0 %v779
    %802 = vmatprep.subr.bf16.mxu0 0
    %803 = vmatpush1.bf16.msra.mxu0 %v780
    %804 = vmatprep.subr.bf16.mxu0 0
    %805 = vmatpush1.bf16.msra.mxu0 %v781
    %806 = vmatprep.subr.bf16.mxu0 0
    %807 = vmatpush1.bf16.msra.mxu0 0
    %808 = vmatprep.subr.bf16.mxu0 0
    %809 = vmatpush1.bf16.msra.mxu0 0
    %810 = vmatprep.subr.bf16.mxu0 0
    %811 = vmatpush1.bf16.msra.mxu0 0
    %812 = vmatprep.subr.bf16.mxu0 0
    %813 = vmatpush1.bf16.msra.mxu0 0
    %814 = vmatprep.subr.bf16.mxu0 0
    %815 = vmatpush1.bf16.msra.mxu0 0
    %816 = vmatprep.subr.bf16.mxu0 0
    %817 = vmatpush1.bf16.msra.mxu0 0
    %818 = vmatprep.subr.bf16.mxu0 0
    %819 = vmatpush1.bf16.msra.mxu0 0
    %820 = vmatprep.subr.bf16.mxu0 0
    %821 = vmatpush1.bf16.msra.mxu0 0
    %822 = vmatprep.subr.bf16.mxu0 0
    %823 = vmatpush1.bf16.msra.mxu0 0
    %824 = vmatprep.subr.bf16.mxu0 0
    %825 = vmatpush1.bf16.msra.mxu0 0
    %826 = vmatprep.subr.bf16.mxu0 0
    %827 = vmatpush1.bf16.msra.mxu0 0
    %828 = vmatprep.subr.bf16.mxu0 0
    %829 = vmatpush1.bf16.msra.mxu0 0
    %830 = vmatprep.mubr.bf16.mxu0 0
    %831 = vmatmul.mubr.bf16.gmra.mrb[0].mxu0 %v787
    %v832 = vpop.f32.mrb[0].mxu0
    %v833 = vadd.f32 %v760, %v832
    %v834 = vpop.f32.mrb[0].mxu0
    %v835 = vpop.f32.mrb[0].mxu0
    %v836 = vadd.f32 %v760, %v835
    %v837 = vpop.f32.mrb[0].mxu0
    %838 = vmatprep.mubr.bf16.mxu0 0
    %839 = vmatmul.mubr.bf16.gmra.mrb[0].mxu0 %v790
    %v840 = vpop.f32.mrb[0].mxu0
    %v841 = vadd.f32 %v760, %v840
    %v842 = vpop.f32.mrb[0].mxu0
    %v843 = vpop.f32.mrb[0].mxu0
    %v844 = vadd.f32 %v760, %v843
    %v845 = vpop.f32.mrb[0].mxu0
    %846 = vmatprep.mubr.bf16.mxu0 0
    %847 = vmatmul.mubr.bf16.gmra.mrb[0].mxu0 %v793
    %v848 = vpop.f32.mrb[0].mxu0
    %v849 = vadd.f32 %v760, %v848
    %v850 = vpop.f32.mrb[0].mxu0
    %v851 = vpop.f32.mrb[0].mxu0
    %v852 = vadd.f32 %v760, %v851
    %v853 = vpop.f32.mrb[0].mxu0
    %854 = vmatprep.mubr.bf16.mxu0 0
    %855 = vmatmul.mubr.bf16.gmra.mrb[0].mxu0 %v796
    %v856 = vpop.f32.mrb[0].mxu0
    %v857 = vadd.f32 %v760, %v856
    %v858 = vpop.f32.mrb[0].mxu0
    %v859 = vpop.f32.mrb[0].mxu0
    %v860 = vadd.f32 %v760, %v859
    %v861 = vpop.f32.mrb[0].mxu0
    %862 = vdwg.mxu0
    %vm863 = vcmask 392192
    %864 = vst.msk [vmem:[%s3] sm:$0xff] %vm863, %v833
    %865 = vst.msk [vmem:[%s3 + $0x8] sm:$0xff] %vm863, %v836
    %866 = vst.msk [vmem:[%s3 + $0x10] sm:$0xff] %vm863, %v841
    %867 = vst.msk [vmem:[%s3 + $0x18] sm:$0xff] %vm863, %v844
    %868 = vst.msk [vmem:[%s3 + $0x20] sm:$0xff] %vm863, %v849
    %869 = vst.msk [vmem:[%s3 + $0x28] sm:$0xff] %vm863, %v852
    %870 = vst.msk [vmem:[%s3 + $0x30] sm:$0xff] %vm863, %v857
    %871 = vst.msk [vmem:[%s3 + $0x38] sm:$0xff] %vm863, %v860
    // Predicated region
    $region18: #{generator2_forward.1} parent=1 // pred_check
      _
    $region19: #{generator2_forward.1} parent=1 // pred_check_branch
      %873 = sbr.rel (0) target = $region21
    $region20: #{generator2_forward.1} parent=1 // pred_region
      _
    $region21: #{generator2_forward.1} parent=1 // pred_fallthru
      _
    // Predicated region
    $region22: #{generator2_forward.1} parent=1 // pred_check
      _
    $region23: #{generator2_forward.1} parent=1 // pred_check_branch
      %875 = sbr.rel (0) target = $region25
    $region24: #{generator2_forward.1} parent=1 // pred_region
      _
    $region25: #{generator2_forward.1} parent=1 // pred_fallthru
      _
    %876 = vsyncpa [#allocation3], 1

</llo_original>
